<compile_context>
chip_gen: v7x
topology: tpu7x:2x2x1
jax: 0.10.0
libtpu: 0.0.40
codegen_flags: <defaults>
</compile_context>

<pallas_src>
from functools import partial

import numpy as np
import jax
import jax.numpy as jnp
from jax.experimental import pallas as pl
from jax.experimental.pallas import tpu as pltpu


def _round_up(x, m):
    return (x + m - 1) // m * m


def _cdiv(a, b):
    return (a + b - 1) // b


def _patch_embed_kernel(x_ref, w_ref, b_ref, o_ref):
    # x_ref: (tm, K) patch rows; w_ref: (K, E_pad); b_ref: (1, E_pad) f32;
    # o_ref: (tm, E_pad).  MXU matmul with f32 accumulation + f32 bias add.
    acc = jnp.dot(x_ref[...], w_ref[...], preferred_element_type=jnp.float32)
    o_ref[...] = (acc + b_ref[...]).astype(o_ref.dtype)


def _vmem_budget_bytes():
    """~70% of per-core VMEM: ~44 MiB on v7x (64 MiB), ~89 MiB on v5e/v6e."""
    cap = None
    try:
        cap = int(pltpu.get_tpu_info().vmem_capacity_bytes)
    except Exception:  # older jax / interpret mode / non-TPU tracing
        cap = None
    if not cap or cap <= 0:
        cap = 64 * 1024 * 1024  # conservative fallback: v7x per-TensorCore VMEM
    return int(cap * 0.7)


def _m_granule(in_itemsize):
    # Full sublane packing for the compute dtype: f32 -> 8, bf16 -> 16, i8/fp8 -> 32.
    return {4: 8, 2: 16, 1: 32}.get(int(in_itemsize), 8)


def _pick_block_m(m, k, e_pad, in_itemsize, out_itemsize, budget_bytes):
    """Largest M tile whose double-buffered footprint (plus resident
    weight/bias buffers) fits the VMEM budget, rounded to the packing granule
    of the compute dtype and capped so the grid has >= 2 M tiles (v7x)."""
    gran = _m_granule(in_itemsize)
    cap = 2048
    if m > gran:  # keep at least two grid steps so both v7x TCs get work
        cap = min(cap, _round_up(_cdiv(m, 2), gran))
    tm = min(_round_up(m, gran), max(gran, _round_up(cap, gran)))
    # weight + bias buffers (conservatively counted double-buffered)
    resident = 2 * (k * e_pad * in_itemsize + e_pad * 4)

    def footprint(t):
        return 2 * t * (k * in_itemsize + e_pad * out_itemsize) + resident

    while tm > gran and footprint(tm) > budget_bytes:
        tm = max(gran, _round_up(tm // 2, gran))
    return max(gran, tm)


@partial(jax.jit, static_argnames=("patch_size", "block_m", "compute_dtype"))
def patch_embed_forward(img, weight, bias, *, patch_size, block_m=None,
                        compute_dtype=jnp.bfloat16):
    """
    img:    (B, C, H, W)  (NCHW, same as PyTorch)
    weight: (E, C, P, P)  (same layout as nn.Conv2d.weight)
    bias:   (E,)
    returns (B, (H//P)*(W//P), E) in img.dtype
    """
    B, C, H, W = img.shape
    E = weight.shape[0]
    P = patch_size
    assert H % P == 0 and W % P == 0, "image H/W must be multiples of patch_size"
    nh, nw = H // P, W // P
    N = nh * nw
    K = C * P * P
    M = B * N

    out_dtype = img.dtype
    out_itemsize = np.dtype(out_dtype).itemsize
    cdt = np.dtype(compute_dtype) if compute_dtype is not None else np.dtype(img.dtype)

    # --- im2col (pure layout glue; candidate for XLA input fusion) ---------
    # (B,C,nh,P,nw,P) -> (B,nh,nw,C,P,P) -> (M,K); K ordered (c, kh, kw) ==
    # exactly the Conv2d weight flattening order.  Cast to the compute dtype
    # first so the materialized array / input DMA is narrow.
    patches = img.astype(cdt).reshape(B, C, nh, P, nw, P)
    patches = patches.transpose(0, 2, 4, 1, 3, 5).reshape(M, K)

    # Conv2d weight (E,C,P,P) -> (K,E) in compute dtype; bias kept f32 (added
    # to the f32 accumulator inside the kernel).
    w_mat = weight.reshape(E, K).T.astype(cdt)
    b_mat = bias.reshape(1, E).astype(jnp.float32)

    # Pad only the tiny E axis to a lane multiple (full MXU tiles, unmasked
    # lane-dense output stores).  No padding of the big activation: M is
    # handled with a ragged last block, K blocks span the full (natural) K.
    E_pad = _round_up(E, 128)
    if E_pad != E:
        w_mat = jnp.pad(w_mat, ((0, 0), (0, E_pad - E)))
        b_mat = jnp.pad(b_mat, ((0, 0), (0, E_pad - E)))

    budget = _vmem_budget_bytes()
    if block_m is None:
        tm = _pick_block_m(M, K, E_pad, cdt.itemsize, out_itemsize, budget)
    else:
        gran = _m_granule(cdt.itemsize)
        tm = max(gran, _round_up(int(block_m), gran))

    grid_m = _cdiv(M, tm)  # ragged last block; its extra rows are discarded

    cost = pl.CostEstimate(
        flops=2 * M * K * E_pad,
        transcendentals=0,
        bytes_accessed=(patches.size * cdt.itemsize
                        + w_mat.size * cdt.itemsize
                        + b_mat.size * 4
                        + M * E_pad * out_itemsize),
    )

    out = pl.pallas_call(
        _patch_embed_kernel,
        out_shape=jax.ShapeDtypeStruct((M, E_pad), out_dtype),
        grid=(grid_m,),
        in_specs=[
            # patch tile marches down M with the grid (double-buffered DMA)
            pl.BlockSpec((tm, K), lambda i: (i, 0)),
            # weight / bias: constant block index -> fetched once, resident
            pl.BlockSpec((K, E_pad), lambda i: (0, 0)),
            pl.BlockSpec((1, E_pad), lambda i: (0, 0)),
        ],
        out_specs=pl.BlockSpec((tm, E_pad), lambda i: (i, 0)),
        compiler_params=pltpu.CompilerParams(
            # Independent M tiles -> shard across TensorCores on v7x.
            dimension_semantics=("parallel",),
            # Generation-aware budget (~70% of per-core VMEM).
            vmem_limit_bytes=budget,
            # Let XLA fuse the im2col transpose/convert into the input DMA.
            allow_input_fusion=[True, False, False],
        ),
        cost_estimate=cost,
    )(patches, w_mat, b_mat)

    if E_pad != E:
        out = out[:, :E]
    return out.reshape(B, N, E)


if __name__ == "__main__":
    # Small, module-consistent shapes: 16x16 image, patch_size 4, 4 channels,
    # emb_dim 32  ->  M = 2*16 = 32 patch rows, K = 64, E = 32 (E_pad = 128).
    B, C, H, W = 2, 4, 16, 16
    P, E = 4, 32

    key = jax.random.PRNGKey(0)
    k_img, k_w, k_b = jax.random.split(key, 3)
    img = jax.random.normal(k_img, (B, C, H, W), dtype=jnp.float32)
    # Deterministic synthetic parameters (not loaded from a checkpoint).
    weight = jax.random.normal(k_w, (E, C, P, P), dtype=jnp.float32) * 0.02
    bias = jax.random.normal(k_b, (E,), dtype=jnp.float32) * 0.02

    # Reference: XLA conv with the exact PyTorch Conv2d semantics.
    ref = jax.lax.conv_general_dilated(
        img, weight, window_strides=(P, P), padding="VALID",
        dimension_numbers=("NCHW", "OIHW", "NCHW"),
    ) + bias.reshape(1, E, 1, 1)
    ref = ref.reshape(B, E, -1).transpose(0, 2, 1)

    # Default path: bf16 MXU operands, f32 accumulate / bias / output.
    out = jax.block_until_ready(
        patch_embed_forward(img, weight, bias, patch_size=P))
    assert out.shape == (B, (H // P) * (W // P), E)
    assert out.dtype == img.dtype              # f32 output, like the PyTorch module
    assert jnp.allclose(out, ref, atol=5e-2, rtol=5e-2)

    # Exact f32 compute path (tight tolerance).
    out_f32 = jax.block_until_ready(
        patch_embed_forward(img, weight, bias, patch_size=P,
                            compute_dtype=jnp.float32))
    assert jnp.allclose(out_f32, ref, atol=1e-4, rtol=1e-4)

    # Ragged last M block (M=32, tm=24 -> grid of 2 with a partial last tile).
    out_ragged = jax.block_until_ready(
        patch_embed_forward(img, weight, bias, patch_size=P,
                            compute_dtype=jnp.float32, block_m=24))
    assert jnp.allclose(out_ragged, ref, atol=1e-4, rtol=1e-4)

    print("KERNEL_OK")
</pallas_src>

<mosaic_0001>
module attributes {stable_mosaic.version = 11 : i64} {
  func.func @_patch_embed_kernel(%arg0: i32, %arg1: memref<16x64xbf16, #tpu.memory_space<vmem>>, %arg2: memref<64x128xbf16, #tpu.memory_space<vmem>>, %arg3: memref<1x128xf32, #tpu.memory_space<vmem>>, %arg4: memref<16x128xf32, #tpu.memory_space<vmem>>) attributes {dimension_semantics = [#tpu.dimension_semantics<parallel>], iteration_bounds = array<i64: 2>, scalar_prefetch = 0 : i64, scratch_operands = 0 : i64, tpu.core_type = #tpu.core_type<tc>, window_params = [{transform_indices = @transform_0, window_bounds = array<i64: 16, 64>}, {pipeline_mode = #tpu.pipeline_mode<synchronous>, transform_indices = @transform_1, window_bounds = array<i64: 64, 128>}, {pipeline_mode = #tpu.pipeline_mode<synchronous>, transform_indices = @transform_2, window_bounds = array<i64: 1, 128>}, {transform_indices = @transform_3, window_bounds = array<i64: 16, 128>}]} {
    %c0 = arith.constant 0 : index
    %c0_0 = arith.constant 0 : index
    %0 = vector.load %arg1[%c0, %c0_0] : memref<16x64xbf16, #tpu.memory_space<vmem>>, vector<16x64xbf16>
    %c0_1 = arith.constant 0 : index
    %c0_2 = arith.constant 0 : index
    %1 = vector.load %arg2[%c0_1, %c0_2] : memref<64x128xbf16, #tpu.memory_space<vmem>>, vector<64x128xbf16>
    %cst = arith.constant dense<0.000000e+00> : vector<16x128xf32>
    %2 = tpu.matmul %0, %1, %cst {dimension_numbers = #tpu.dot_dimension_numbers<[1], [0], [0], [1], [0, 0, 1, 1], [], []>} : vector<16x64xbf16>, vector<64x128xbf16>, vector<16x128xf32> -> vector<16x128xf32>
    %c0_3 = arith.constant 0 : index
    %c0_4 = arith.constant 0 : index
    %3 = vector.load %arg3[%c0_3, %c0_4] : memref<1x128xf32, #tpu.memory_space<vmem>>, vector<1x128xf32>
    %4 = vector.broadcast %3 : vector<1x128xf32> to vector<16x128xf32>
    %5 = arith.addf %2, %4 : vector<16x128xf32>
    %c0_5 = arith.constant 0 : index
    %c0_6 = arith.constant 0 : index
    %6 = vector.load %arg4[%c0_5, %c0_6] : memref<16x128xf32, #tpu.memory_space<vmem>>, vector<16x128xf32>
    tpu.vector_store %arg4[%c0_5, %c0_6], %5 {strides = array<i32>} : memref<16x128xf32, #tpu.memory_space<vmem>>, vector<16x128xf32>,
    return
  }
  func.func @transform_0(%arg0: i32) -> (i32, i32) {
    %c0_i32 = arith.constant 0 : i32
    %c0_i32_0 = arith.constant 0 : i32
    return %arg0, %c0_i32 : i32, i32
  }
  func.func @transform_1(%arg0: i32) -> (i32, i32) {
    %c0_i32 = arith.constant 0 : i32
    %c0_i32_0 = arith.constant 0 : i32
    %c0_i32_1 = arith.constant 0 : i32
    return %c0_i32, %c0_i32_0 : i32, i32
  }
  func.func @transform_2(%arg0: i32) -> (i32, i32) {
    %c0_i32 = arith.constant 0 : i32
    %c0_i32_0 = arith.constant 0 : i32
    %c0_i32_1 = arith.constant 0 : i32
    return %c0_i32, %c0_i32_0 : i32, i32
  }
  func.func @transform_3(%arg0: i32) -> (i32, i32) {
    %c0_i32 = arith.constant 0 : i32
    %c0_i32_0 = arith.constant 0 : i32
    return %arg0, %c0_i32 : i32, i32
  }
}

</mosaic_0001>

<llo_original>
// kernel: patch_embed_forward.1
$region0: #{patch_embed_forward.1}
  #allocation0 [shape = 'u32[]', space=smem, size = 0x4, offset = 0x4, fixed_abs, tag = 'smem constant byte address 0x4 - core index']
  #allocation1 [shape = 'u32[144,128]{1,0:T(1,128)}', space=vmem, size = 0x12000, scoped, tag = 'internal scratch']
  %s0 = inlined_call_operand.vmem [shape: bf16[32,64], index: 0, kind: input, shape index: {}]
  %s1 = inlined_call_operand.vmem [shape: bf16[64,128], index: 1, kind: input, shape index: {}]
  %s2 = inlined_call_operand.vmem [shape: f32[1,128], index: 2, kind: input, shape index: {}]
  %s3 = inlined_call_operand.hbm [shape: f32[32,128], index: 3, kind: output, shape index: {}]
  %s4 = sld [smem:[#allocation0]]
  $region45: #{patch_embed_forward.1} parent=0
    _
  %s6 = ssub.s32 1, %s4
  %s7 = scalar_select 0, %s6, %s4
  $region1: #{patch_embed_forward.1} parent=0
    #allocation2 [shape = 'u8[16384]{0}', space=vmem, size = 0x4000, scoped, tag = 'output window, operand 0']
    #allocation3 [shape = 's32[2]{0}', space=sflag, size = 0x8, scoped, tag = 'scoped memory for patch_embed_forward.1']
    %8 = vsyncpa [#allocation3], 0
    %s9 = scalar_lea.sflag [#allocation3], 1
    %10 = vsyncpa %s9, 0
    loop: start=0, step=1, limit=4
    $region2: #{patch_embed_forward.1} parent=1 // loop_pre_header
      _
    $region3: #{patch_embed_forward.1} parent=1 // loop_header
      %s12 = sphi 0, %s16
      %p13 = scmp.ge.s32.totalorder %s12, 4
      %s22 = sphi 0, %s24
      %s25 = sphi 0, %s22
      %s26 = sphi 0, %s25
      %s42 = sphi 0, %s26
      %s46 = sphi 0, %s46
      %s48 = sphi 0, %s46
      %s49 = sphi 0, %s48
      %s63 = sphi 0, %s49
      %s67 = sphi 0, %s67
      %s69 = sphi 0, %s67
      %s70 = sphi 0, %s69
      %s84 = sphi 0, %s70
      %s90 = sphi 0, %s92
      %s93 = sphi 0, %s90
      %s94 = sphi 0, %s93
      %s110 = sphi 0, %s94
    $region4: #{patch_embed_forward.1} parent=1 // loop_header_branch
      %15 = sbr.rel (%p13) target = $region8
    $region5: #{patch_embed_forward.1} parent=1 // loop_body
      %s17 = ssub.s32 %s12, 1
      %s18 = ssub.s32 %s12, 2
      %s19 = sadd.s32 %s12, 1
      %s20 = ssub.s32 %s12, %s19
      %p21 = scmp.eq.s32.totalorder %s20, 0
      %s23 = sadd.s32 %s22, 1
      %s24 = scalar_select %p21, %s22, %s23
      %p27 = pneg %p21
      %p28 = scmp.eq.s32.totalorder %s12, 1
      %p29 = por %p27, %p28
      %p30 = scmp.ne.s32.totalorder %s22, %s25
      %p31 = scmp.eq.s32.totalorder %s12, 0
      %p32 = por %p30, %p31
      %p33 = scmp.ne.s32.totalorder %s22, %s25
      %p34 = scmp.eq.s32.totalorder %s17, 1
      %p35 = por %p33, %p34
      %p36 = scmp.ne.s32.totalorder %s25, %s26
      %p37 = scmp.eq.s32.totalorder %s17, 0
      %p38 = por %p36, %p37
      %p39 = scmp.ne.s32.totalorder %s25, %s26
      %p40 = scmp.eq.s32.totalorder %s18, 1
      %p41 = por %p39, %p40
      %p43 = scmp.ne.s32.totalorder %s26, %s42
      %p44 = scmp.eq.s32.totalorder %s18, 0
      %p45 = por %p43, %p44
      %s47 = sadd.s32 %s46, 1
      %p50 = scmp.eq.s32.totalorder %s12, 1
      %p51 = scmp.ne.s32.totalorder %s46, %s48
      %p52 = scmp.eq.s32.totalorder %s12, 0
      %p53 = por %p51, %p52
      %p54 = scmp.ne.s32.totalorder %s46, %s48
      %p55 = scmp.eq.s32.totalorder %s17, 1
      %p56 = por %p54, %p55
      %p57 = scmp.ne.s32.totalorder %s48, %s49
      %p58 = scmp.eq.s32.totalorder %s17, 0
      %p59 = por %p57, %p58
      %p60 = scmp.ne.s32.totalorder %s48, %s49
      %p61 = scmp.eq.s32.totalorder %s18, 1
      %p62 = por %p60, %p61
      %p64 = scmp.ne.s32.totalorder %s49, %s63
      %p65 = scmp.eq.s32.totalorder %s18, 0
      %p66 = por %p64, %p65
      %s68 = sadd.s32 %s67, 1
      %p71 = scmp.eq.s32.totalorder %s12, 1
      %p72 = scmp.ne.s32.totalorder %s67, %s69
      %p73 = scmp.eq.s32.totalorder %s12, 0
      %p74 = por %p72, %p73
      %p75 = scmp.ne.s32.totalorder %s67, %s69
      %p76 = scmp.eq.s32.totalorder %s17, 1
      %p77 = por %p75, %p76
      %p78 = scmp.ne.s32.totalorder %s69, %s70
      %p79 = scmp.eq.s32.totalorder %s17, 0
      %p80 = por %p78, %p79
      %p81 = scmp.ne.s32.totalorder %s69, %s70
      %p82 = scmp.eq.s32.totalorder %s18, 1
      %p83 = por %p81, %p82
      %p85 = scmp.ne.s32.totalorder %s70, %s84
      %p86 = scmp.eq.s32.totalorder %s18, 0
      %p87 = por %p85, %p86
      %s88 = ssub.s32 %s12, %s19
      %p89 = scmp.eq.s32.totalorder %s88, 0
      %s91 = sadd.s32 %s90, 1
      %s92 = scalar_select %p89, %s90, %s91
      %p95 = pneg %p89
      %p96 = scmp.eq.s32.totalorder %s12, 1
      %p97 = por %p95, %p96
      %p98 = scmp.ne.s32.totalorder %s90, %s93
      %p99 = scmp.eq.s32.totalorder %s12, 0
      %p100 = por %p98, %p99
      %p101 = scmp.ne.s32.totalorder %s90, %s93
      %p102 = scmp.eq.s32.totalorder %s17, 1
      %p103 = por %p101, %p102
      %p104 = scmp.ne.s32.totalorder %s93, %s94
      %p105 = scmp.eq.s32.totalorder %s17, 0
      %p106 = por %p104, %p105
      %p107 = scmp.ne.s32.totalorder %s93, %s94
      %p108 = scmp.eq.s32.totalorder %s18, 1
      %p109 = por %p107, %p108
      %p111 = scmp.ne.s32.totalorder %s94, %s110
      %p112 = scmp.eq.s32.totalorder %s18, 0
      %p113 = por %p111, %p112
      %p114 = scmp.le.s32.totalorder 1, %s12
      %p115 = scmp.lt.s32.totalorder %s12, 3
      %p116 = pnand %p114, %p115
      %p117 = pneg %p116
      // Predicated region
      $region9: #{patch_embed_forward.1} parent=5 // pred_check
        _
      $region10: #{patch_embed_forward.1} parent=5 // pred_check_branch
        %119 = sbr.rel (%p116) target = $region12
      $region11: #{patch_embed_forward.1} parent=5 // pred_region
        %s120 = ssub.s32 %s12, 1
        // Predicated region
        $region13: #{patch_embed_forward.1} parent=11 // pred_check
          %p121 = pneg %p59
        $region14: #{patch_embed_forward.1} parent=11 // pred_check_branch
          %123 = sbr.rel (%p121) target = $region16
        $region15: #{patch_embed_forward.1} parent=11 // pred_region
          _
        $region16: #{patch_embed_forward.1} parent=11 // pred_fallthru
          _
        // Predicated region
        $region17: #{patch_embed_forward.1} parent=11 // pred_check
          %p124 = pneg %p80
        $region18: #{patch_embed_forward.1} parent=11 // pred_check_branch
          %126 = sbr.rel (%p124) target = $region20
        $region19: #{patch_embed_forward.1} parent=11 // pred_region
          _
        $region20: #{patch_embed_forward.1} parent=11 // pred_fallthru
          _
      $region12: #{patch_embed_forward.1} parent=5 // pred_fallthru
        _
      %p127 = scmp.lt.s32.totalorder %s12, 2
      // Predicated region
      $region21: #{patch_embed_forward.1} parent=5 // pred_check
        %p128 = pneg %p127
      $region22: #{patch_embed_forward.1} parent=5 // pred_check_branch
        %130 = sbr.rel (%p128) target = $region24
      $region23: #{patch_embed_forward.1} parent=5 // pred_region
        // Predicated region
        $region25: #{patch_embed_forward.1} parent=23 // pred_check
          %p131 = pneg %p32
        $region26: #{patch_embed_forward.1} parent=23 // pred_check_branch
          %133 = sbr.rel (%p131) target = $region28
        $region27: #{patch_embed_forward.1} parent=23 // pred_region
          %s134 = smul.u32 2, %s12
          %p135 = scmp.lt.s32.totalorder %s134, 3
          %s136 = scalar_select %p135, %s134, 3
          %s137 = smul.addr %s136, 4
          %s138 = scalar_lea.vmem %s0, %s137
          %s139 = smul.u32 2, %s12
        $region28: #{patch_embed_forward.1} parent=23 // pred_fallthru
          _
      $region24: #{patch_embed_forward.1} parent=5 // pred_fallthru
        _
      %p140 = scmp.le.s32.totalorder 1, %s12
      %p141 = scmp.lt.s32.totalorder %s12, 3
      %p142 = pnand %p140, %p141
      %p143 = pneg %p142
      // Predicated region
      $region29: #{patch_embed_forward.1} parent=5 // pred_check
        _
      $region30: #{patch_embed_forward.1} parent=5 // pred_check_branch
        %145 = sbr.rel (%p142) target = $region32
      $region31: #{patch_embed_forward.1} parent=5 // pred_region
        %s146 = ssub.s32 %s12, 1
        %s147 = smul.u32 2, %s17
        %p148 = scmp.lt.s32.totalorder %s147, 3
        %s149 = scalar_select %p148, %s147, 3
        %s150 = smul.addr %s149, 4
        %s151 = scalar_lea.vmem %s0, %s150
        %p152 = pneg %p38
        %p153 = pneg %p35
        %p154 = pneg %p59
        %p155 = pneg %p56
        %p156 = pneg %p80
        %p157 = pneg %p77
        %p158 = pneg %p106
        %p159 = pneg %p103
        %s160 = sand.u32 %s93, 1
        %s161 = scalar_lea.sflag [#allocation3], %s160
        %s162 = sand.u32 %s93, 1
        %s163 = smul.addr %s162, 16
        %s164 = scalar_lea.vmem [#allocation2], %s163
        %s165 = smul.u32 2, %s17
        %p166 = scmp.lt.s32.totalorder %s165, 3
        %s167 = scalar_select %p166, %s165, 3
        %s168 = smul.addr %s167, 4
        %s169 = scalar_lea.vmem %s0, %s168
        %s170 = smul.u32 2, %s17
        %s171 = smul.u32 2, %s17
        %v173 = vld [vmem:[%s169] sm:$0xf]
        %v174 = vld [vmem:[%s169 + $0x4] sm:$0xf]
        %v175 = vld [vmem:[%s1] sm:$0xf]
        %v176 = vld [vmem:[%s1 + $0x4] sm:$0xf]
        %v177 = vld [vmem:[%s1 + $0x8] sm:$0xf]
        %v178 = vld [vmem:[%s1 + $0xc] sm:$0xf]
        %v179 = vld [vmem:[%s1 + $0x10] sm:$0xf]
        %v180 = vld [vmem:[%s1 + $0x14] sm:$0xf]
        %v181 = vld [vmem:[%s1 + $0x18] sm:$0xf]
        %v182 = vld [vmem:[%s1 + $0x1c] sm:$0xf]
        %v183 = vld [vmem:[%s2] sm:$0x1]
        %v185 = vlaneseq
        %v186 = vshrl.u32 %v185, 7
        %v187 = vsub.s32 0, %v186
        %v188 = vrot.slane %v183, %v187
        %v192 = vunpack.c.l.b16 %v173
        %v193 = vunpack.c.l.b16 %v174
        %v194 = vpack.c.b16 %v193, %v192
        %v203 = vunpack.c.l.b16 %v175
        %v204 = vunpack.c.l.b16 %v176
        %v205 = vunpack.c.l.b16 %v177
        %v206 = vunpack.c.l.b16 %v178
        %v207 = vunpack.c.l.b16 %v179
        %v208 = vunpack.c.l.b16 %v180
        %v209 = vunpack.c.l.b16 %v181
        %v210 = vunpack.c.l.b16 %v182
        %v211 = vpack.c.b16 %v204, %v203
        %v212 = vpack.c.b16 %v206, %v205
        %v213 = vpack.c.b16 %v208, %v207
        %v214 = vpack.c.b16 %v210, %v209
        %vm219 = vcmask 523264
        %v221 = vsel %vm219, %v194, 0
        %223 = vmatprep.subr.bf16.mxu0 0
        %224 = vmatpush1.bf16.msra.mxu0 %v211
        %225 = vmatprep.subr.bf16.mxu0 0
        %226 = vmatpush1.bf16.msra.mxu0 %v212
        %227 = vmatprep.subr.bf16.mxu0 0
        %228 = vmatpush1.bf16.msra.mxu0 %v213
        %229 = vmatprep.subr.bf16.mxu0 0
        %230 = vmatpush1.bf16.msra.mxu0 %v214
        %231 = vmatprep.subr.bf16.mxu0 0
        %232 = vmatpush1.bf16.msra.mxu0 0
        %233 = vmatprep.subr.bf16.mxu0 0
        %234 = vmatpush1.bf16.msra.mxu0 0
        %235 = vmatprep.subr.bf16.mxu0 0
        %236 = vmatpush1.bf16.msra.mxu0 0
        %237 = vmatprep.subr.bf16.mxu0 0
        %238 = vmatpush1.bf16.msra.mxu0 0
        %239 = vmatprep.subr.bf16.mxu0 0
        %240 = vmatpush1.bf16.msra.mxu0 0
        %241 = vmatprep.subr.bf16.mxu0 0
        %242 = vmatpush1.bf16.msra.mxu0 0
        %243 = vmatprep.subr.bf16.mxu0 0
        %244 = vmatpush1.bf16.msra.mxu0 0
        %245 = vmatprep.subr.bf16.mxu0 0
        %246 = vmatpush1.bf16.msra.mxu0 0
        %247 = vmatprep.subr.bf16.mxu0 0
        %248 = vmatpush1.bf16.msra.mxu0 0
        %249 = vmatprep.subr.bf16.mxu0 0
        %250 = vmatpush1.bf16.msra.mxu0 0
        %251 = vmatprep.subr.bf16.mxu0 0
        %252 = vmatpush1.bf16.msra.mxu0 0
        %253 = vmatprep.subr.bf16.mxu0 0
        %254 = vmatpush1.bf16.msra.mxu0 0
        %255 = vmatprep.mubr.bf16.mxu0 0
        %256 = vmatmul.mubr.bf16.gmra.mrb[0].mxu0 %v221
        %v257 = vpop.f32.mrb[0].mxu0
        %v258 = vadd.f32 %v188, %v257
        %v259 = vpop.f32.mrb[0].mxu0
        %v260 = vpop.f32.mrb[0].mxu0
        %v261 = vadd.f32 %v188, %v260
        %v262 = vpop.f32.mrb[0].mxu0
        %263 = vdwg.mxu0
        %264 = vst [vmem:[%s164] sm:$0xff] %v258
        %265 = vst [vmem:[%s164 + $0x8] sm:$0xff] %v261
        %s266 = sand.u32 %s93, 1
        %s267 = scalar_lea.sflag [#allocation3], %s266
        %s268 = sand.u32 %s93, 1
        %s269 = smul.addr %s268, 16
        %s270 = scalar_lea.vmem [#allocation2], %s269
        // Predicated region
        $region33: #{patch_embed_forward.1} parent=31 // pred_check
          %p271 = pneg %p103
        $region34: #{patch_embed_forward.1} parent=31 // pred_check_branch
          %273 = sbr.rel (%p271) target = $region36
        $region35: #{patch_embed_forward.1} parent=31 // pred_region
          %s274 = smul.u32 2, %s17
          %s276 = ssub.s32 256, 256
          %277 = vsyncadd %s267, %s276
          %s278 = smul.addr %s274, 128
          %s279 = scalar_lea.hbm %s3, %s278
          %s280 = sshll.u32 %s270, 4
          %s281 = int_to_ptr.vmem [resolvable:$true] %s280
          %286 = dma.vmem_to_hbm [thread:$0]  %s281, 256, %s279, %s267, 128, 128, 8
        $region36: #{patch_embed_forward.1} parent=31 // pred_fallthru
          _
      $region32: #{patch_embed_forward.1} parent=5 // pred_fallthru
        _
      %p287 = scmp.le.s32.totalorder 2, %s12
      // Predicated region
      $region37: #{patch_embed_forward.1} parent=5 // pred_check
        %p288 = pneg %p287
      $region38: #{patch_embed_forward.1} parent=5 // pred_check_branch
        %290 = sbr.rel (%p288) target = $region40
      $region39: #{patch_embed_forward.1} parent=5 // pred_region
        %s291 = ssub.s32 %s12, 2
        // Predicated region
        $region41: #{patch_embed_forward.1} parent=39 // pred_check
          %p292 = pneg %p109
        $region42: #{patch_embed_forward.1} parent=39 // pred_check_branch
          %294 = sbr.rel (%p292) target = $region44
        $region43: #{patch_embed_forward.1} parent=39 // pred_region
          %s295 = sand.u32 %s94, 1
          %s296 = scalar_lea.sflag [#allocation3], %s295
          %s297 = sand.u32 %s94, 1
          %s298 = smul.addr %s297, 16
          %s299 = scalar_lea.vmem [#allocation2], %s298
          %300 = dma.done %s296, 256
        $region44: #{patch_embed_forward.1} parent=39 // pred_fallthru
          _
      $region40: #{patch_embed_forward.1} parent=5 // pred_fallthru
        _
    $region6: #{patch_embed_forward.1} parent=1 // loop_footer
      %s16 = sadd.s32 1, %s12
    $region7: #{patch_embed_forward.1} parent=1 // loop_footer_branch
      %11 = sbr.rel target = $region3
    $region8: #{patch_embed_forward.1} parent=1 // loop_exit
      _
    %301 = vsyncpa [#allocation3], 1
    %s302 = scalar_lea.sflag [#allocation3], 1
    %303 = vsyncpa %s302, 1

</llo_original>
